<compile_context>
chip_gen: v5e
topology: v5e:2x2
jax: 0.10.0
libtpu: 0.0.40
codegen_flags: <defaults>
</compile_context>

<pallas_src>
import functools

import jax
import jax.numpy as jnp
from jax.experimental import pallas as pl
from jax.experimental.pallas import tpu as pltpu


def _int_pow(x, n):
    """x ** n for a static positive integer n, via multiplies only (VPU)."""
    result = None
    base = x
    while n > 0:
        if n & 1:
            result = base if result is None else result * base
        n >>= 1
        if n:
            base = base * base
    return result


def _gem_kernel(p_ref, x_ref, o_ref, acc_ref, *, eps, hw, hw_tile, inv_hw,
                need_mask, static_p):
    # p_ref: (1,) SMEM; x_ref: (nc_tile, hw_tile) VMEM; o_ref: (nc_tile, 1) VMEM;
    # acc_ref: (nc_tile, 1) f32 VMEM scratch (running sum over the HW grid axis).
    k = pl.program_id(1)

    @pl.when(k == 0)
    def _init():
        acc_ref[...] = jnp.zeros_like(acc_ref)

    # TODO(synk): bf16 EUP fast path on v6e/v7x (log/exp in bf16, f32 accumulate)
    # once validated against tolerance; v5e's EUP has no bf16 so keep f32 there.
    x = x_ref[...].astype(jnp.float32)
    x = jnp.maximum(x, eps)                            # clamp(min=eps) -> x > 0

    if need_mask:
        lane = jax.lax.broadcasted_iota(jnp.int32, x.shape, 1) + k * hw_tile
        valid = lane < hw
        x = jnp.where(valid, x, 1.0)                   # keep transcendentals finite

    if static_p is None:
        p = p_ref[0]
        xp = jnp.exp(p * jnp.log(x))                   # x ** p, runtime exponent (EUP)
    else:
        xp = _int_pow(x, static_p)                     # x ** p, static int (VPU only)

    if need_mask:
        xp = jnp.where(valid, xp, 0.0)                 # drop HW-tail padding

    acc_ref[...] += jnp.sum(xp, axis=1, keepdims=True)  # lane reduce -> (nc_tile, 1)

    @pl.when(k == pl.num_programs(1) - 1)
    def _finalize():
        mean = acc_ref[...] * inv_hw
        inv_p = (1.0 / static_p) if static_p is not None else (1.0 / p_ref[0])
        o_ref[...] = jnp.exp(jnp.log(mean) * inv_p).astype(o_ref.dtype)


def _pick_tiles(nc, hw, itemsize, hw_tile_max=2048):
    """Tile sizes from an f32 working-set budget (dbl-buffered input + f32 temps)."""
    hw_tile = hw if hw <= hw_tile_max else hw_tile_max   # full extent or 128-multiple

    budget_bytes = 8 << 20                     # per-block working-set target
    per_elem_bytes = 2 * itemsize + 8          # 2x input (double buffer) + ~2 f32 temps
    max_rows = max(8, (budget_bytes // (per_elem_bytes * hw_tile)) // 8 * 8)

    nc_tile = nc if nc <= max_rows else max_rows   # full-extent block is always legal

    # v7x megacore: keep >= ~8 steps on the "parallel" NC axis when nc is large.
    if nc >= 256:
        cap = max(8, ((-(-nc // 8)) + 7) // 8 * 8)
        nc_tile = min(nc_tile, cap)

    return nc_tile, hw_tile


def gem_pallas(x, p, eps=1e-6, *, static_p=None, hw_tile_max=2048):
    """GeM pooling.  x: (N, C, H, W); p: shape-(1,) learned exponent.
    Returns (N, C, 1, 1) in x.dtype.  If `static_p` is an int, x**p is
    specialized to VPU multiplies (the runtime p is ignored in the main loop).
    """
    N, C, H, W = x.shape
    nc, hw = N * C, H * W

    x2 = x.reshape(nc, hw)                     # free metadata reshape, no HBM copy
    p = jnp.asarray(p, jnp.float32).reshape((1,))

    nc_tile, hw_tile = _pick_tiles(nc, hw, x.dtype.itemsize, hw_tile_max)
    grid = (pl.cdiv(nc, nc_tile), pl.cdiv(hw, hw_tile))
    need_mask = (hw % hw_tile) != 0

    transcendentals = (2 * nc * hw if static_p is None else 0) + 2 * nc
    cost = pl.CostEstimate(
        flops=3 * nc * hw + 5 * nc,
        transcendentals=transcendentals,
        bytes_accessed=nc * hw * x.dtype.itemsize + nc * x.dtype.itemsize + 4,
    )

    kernel = functools.partial(
        _gem_kernel, eps=float(eps), hw=hw, hw_tile=hw_tile,
        inv_hw=1.0 / float(hw), need_mask=need_mask, static_p=static_p)

    out = pl.pallas_call(
        kernel,
        out_shape=jax.ShapeDtypeStruct((nc, 1), x.dtype),
        grid=grid,
        in_specs=[
            pl.BlockSpec(memory_space=pltpu.MemorySpace.SMEM),        # p (scalar)
            pl.BlockSpec((nc_tile, hw_tile), lambda i, k: (i, k)),    # x block
        ],
        out_specs=pl.BlockSpec((nc_tile, 1), lambda i, k: (i, 0)),
        scratch_shapes=[pltpu.VMEM((nc_tile, 1), jnp.float32)],
        compiler_params=pltpu.CompilerParams(
            dimension_semantics=("parallel", "arbitrary"),
            vmem_limit_bytes=32 << 20,
        ),
        cost_estimate=cost,
    )(p, x2)

    return out.reshape(N, C, 1, 1)


if __name__ == "__main__":
    key = jax.random.PRNGKey(0)
    N, C, H, W = 2, 4, 16, 16
    x = jax.random.normal(key, (N, C, H, W), dtype=jnp.float32)

    # Deterministic parameter init, matching nn.Parameter(torch.ones(1) * 3)
    p = jnp.ones((1,), dtype=jnp.float32) * 3.0
    eps = 1e-6

    def ref(xv, pv):
        return jnp.mean(jnp.maximum(xv, eps) ** pv, axis=(-2, -1), keepdims=True) ** (1.0 / pv)

    # Runtime-p path (matches the nn.Parameter semantics of the module).
    y = gem_pallas(x, p, eps)
    jax.block_until_ready(y)
    assert y.shape == (N, C, 1, 1)
    assert jnp.allclose(y, ref(x, p[0]), rtol=1e-4, atol=1e-5)

    # Static-p specialization (common fixed p=3): VPU multiplies, no per-element EUP.
    y_s = gem_pallas(x, p, eps, static_p=3)
    jax.block_until_ready(y_s)
    assert jnp.allclose(y_s, ref(x, 3.0), rtol=1e-4, atol=1e-5)

    # Exercise the HW reduction grid axis + tail masking (hw=400 not a tile multiple).
    x2 = jax.random.normal(jax.random.PRNGKey(1), (2, 4, 20, 20), dtype=jnp.float32)
    y2 = gem_pallas(x2, p, eps, hw_tile_max=128)
    jax.block_until_ready(y2)
    assert jnp.allclose(y2, ref(x2, p[0]), rtol=1e-4, atol=1e-5)

    print("KERNEL_OK")
</pallas_src>

<mosaic_0001>
module attributes {stable_mosaic.version = 11 : i64} {
  func.func @_gem_kernel(%arg0: i32, %arg1: i32, %arg2: memref<1xf32, #tpu.memory_space<smem>>, %arg3: memref<8x256xf32, #tpu.memory_space<vmem>>, %arg4: memref<8x1xf32, #tpu.memory_space<vmem>>, %arg5: memref<8x1xf32, #tpu.memory_space<vmem>>) attributes {dimension_semantics = [#tpu.dimension_semantics<parallel>, #tpu.dimension_semantics<arbitrary>], iteration_bounds = array<i64: 1, 1>, scalar_prefetch = 0 : i64, scratch_operands = 1 : i64, tpu.core_type = #tpu.core_type<tc>, window_params = [{transform_indices = @transform_0, window_bounds = array<i64: 1>}, {transform_indices = @transform_1, window_bounds = array<i64: 8, 256>}, {transform_indices = @transform_2, window_bounds = array<i64: 8, 1>}]} {
    %c0_i32 = arith.constant 0 : i32
    %0 = arith.cmpi eq, %arg1, %c0_i32 : i32
    %1 = arith.extui %0 : i1 to i32
    %c0_i32_0 = arith.constant 0 : i32
    %2 = arith.cmpi ne, %1, %c0_i32_0 : i32
    scf.if %2 {
      %cst_10 = arith.constant 0.000000e+00 : f32
      %19 = vector.broadcast %cst_10 : f32 to vector<8x1xf32>
      %c0_11 = arith.constant 0 : index
      %c0_12 = arith.constant 0 : index
      %20 = vector.load %arg5[%c0_11, %c0_12] : memref<8x1xf32, #tpu.memory_space<vmem>>, vector<8x1xf32>
      tpu.vector_store %arg5[%c0_11, %c0_12], %19 {strides = array<i32>} : memref<8x1xf32, #tpu.memory_space<vmem>>, vector<8x1xf32>,
    } else {
    }
    %c0 = arith.constant 0 : index
    %c0_1 = arith.constant 0 : index
    %3 = vector.load %arg3[%c0, %c0_1] : memref<8x256xf32, #tpu.memory_space<vmem>>, vector<8x256xf32>
    %cst = arith.constant 9.99999997E-7 : f32
    %4 = vector.broadcast %cst : f32 to vector<8x256xf32>
    %5 = arith.maximumf %3, %4 : vector<8x256xf32>
    %c0_2 = arith.constant 0 : index
    %6 = memref.load %arg2[%c0_2] : memref<1xf32, #tpu.memory_space<smem>>
    %7 = math.log %5 : vector<8x256xf32>
    %8 = vector.broadcast %6 : f32 to vector<8x256xf32>
    %9 = arith.mulf %8, %7 : vector<8x256xf32>
    %10 = math.exp %9 : vector<8x256xf32>
    %c0_3 = arith.constant 0 : index
    %c0_4 = arith.constant 0 : index
    %11 = vector.load %arg5[%c0_3, %c0_4] : memref<8x1xf32, #tpu.memory_space<vmem>>, vector<8x1xf32>
    %cst_5 = arith.constant dense<0.000000e+00> : vector<8xf32>
    %12 = vector.multi_reduction <add>, %10, %cst_5 [1] : vector<8x256xf32> to vector<8xf32>
    %13 = vector.shape_cast %12 : vector<8xf32> to vector<8x1xf32>
    %14 = arith.addf %11, %13 : vector<8x1xf32>
    %c0_6 = arith.constant 0 : index
    %c0_7 = arith.constant 0 : index
    %15 = vector.load %arg5[%c0_6, %c0_7] : memref<8x1xf32, #tpu.memory_space<vmem>>, vector<8x1xf32>
    tpu.vector_store %arg5[%c0_6, %c0_7], %14 {strides = array<i32>} : memref<8x1xf32, #tpu.memory_space<vmem>>, vector<8x1xf32>,
    %c0_i32_8 = arith.constant 0 : i32
    %16 = arith.cmpi eq, %arg1, %c0_i32_8 : i32
    %17 = arith.extui %16 : i1 to i32
    %c0_i32_9 = arith.constant 0 : i32
    %18 = arith.cmpi ne, %17, %c0_i32_9 : i32
    scf.if %18 {
      %c0_10 = arith.constant 0 : index
      %c0_11 = arith.constant 0 : index
      %19 = vector.load %arg5[%c0_10, %c0_11] : memref<8x1xf32, #tpu.memory_space<vmem>>, vector<8x1xf32>
      %cst_12 = arith.constant 3.906250e-03 : f32
      %20 = vector.broadcast %cst_12 : f32 to vector<8x1xf32>
      %21 = arith.mulf %19, %20 : vector<8x1xf32>
      %c0_13 = arith.constant 0 : index
      %22 = memref.load %arg2[%c0_13] : memref<1xf32, #tpu.memory_space<smem>>
      %cst_14 = arith.constant 1.000000e+00 : f32
      %23 = arith.divf %cst_14, %22 : f32
      %24 = math.log %21 : vector<8x1xf32>
      %25 = vector.broadcast %23 : f32 to vector<8x1xf32>
      %26 = arith.mulf %24, %25 : vector<8x1xf32>
      %27 = math.exp %26 : vector<8x1xf32>
      %c0_15 = arith.constant 0 : index
      %c0_16 = arith.constant 0 : index
      %28 = vector.load %arg4[%c0_15, %c0_16] : memref<8x1xf32, #tpu.memory_space<vmem>>, vector<8x1xf32>
      tpu.vector_store %arg4[%c0_15, %c0_16], %27 {strides = array<i32>} : memref<8x1xf32, #tpu.memory_space<vmem>>, vector<8x1xf32>,
    } else {
    }
    return
  }
  func.func @transform_0(%arg0: i32, %arg1: i32) -> i32 {
    %c0_i32 = arith.constant 0 : i32
    %c0_i32_0 = arith.constant 0 : i32
    return %c0_i32 : i32
  }
  func.func @transform_1(%arg0: i32, %arg1: i32) -> (i32, i32) {
    %c0_i32 = arith.constant 0 : i32
    return %arg0, %arg1 : i32, i32
  }
  func.func @transform_2(%arg0: i32, %arg1: i32) -> (i32, i32) {
    %c0_i32 = arith.constant 0 : i32
    %c0_i32_0 = arith.constant 0 : i32
    return %arg0, %c0_i32 : i32, i32
  }
}

</mosaic_0001>

<llo_original>
// kernel: tpu_custom_call.1
$region0: #{tpu_custom_call.1}
  #allocation0 [shape = 'u32[]', space=smem, size = 0x4, offset = 0x4, fixed_abs, tag = 'smem constant byte address 0x4 - core index']
  #allocation1 [shape = 'u32[72,128]{1,0:T(1,128)}', space=vmem, size = 0x9000, scoped, tag = 'internal scratch']
  #allocation2 [shape = 'f32[8,1]{1,0:T(8,128)}', space=vmem, size = 0x1000, scoped, tag = 'scratch operand']
  #allocation3 [shape = 'f32[1]{0:T(128)S(6)}', space=smem, size = 0x200, scoped, tag = 'scoped memory for tpu_custom_call.1']
  %s0 = inlined_call_operand.<no memory space> [shape: f32[1], index: 0, kind: input, shape index: {}]
  %s1 = inlined_call_operand.hbm [shape: f32[8,256], index: 1, kind: input, shape index: {}]
  %s2 = inlined_call_operand.vmem [shape: f32[8,1], index: 2, kind: output, shape index: {}]
  %s3 = sld [smem:[#allocation0]]
  $region30: #{tpu_custom_call.1} parent=0
    _
  %s5 = ssub.s32 1, %s3
  %s6 = scalar_select 0, %s5, %s3
  %7 = sst [smem:[#allocation3]] %s0
  $region1: #{tpu_custom_call.1} parent=0
    #allocation4 [shape = 'u8[8192]{0}', space=vmem, size = 0x2000, scoped, tag = 'input window, operand 1, single buffered']
    #allocation5 [shape = 's32[1]{0}', space=sflag, size = 0x4, scoped, tag = 'scoped memory for tpu_custom_call.1']
    %8 = vsyncpa [#allocation5], 0
    // Predicated region
    $region2: #{tpu_custom_call.1} parent=1 // pred_check
      _
    $region3: #{tpu_custom_call.1} parent=1 // pred_check_branch
      %10 = sbr.rel (0) target = $region5
    $region4: #{tpu_custom_call.1} parent=1 // pred_region
      _
    $region5: #{tpu_custom_call.1} parent=1 // pred_fallthru
      _
    // Predicated region
    $region6: #{tpu_custom_call.1} parent=1 // pred_check
      _
    $region7: #{tpu_custom_call.1} parent=1 // pred_check_branch
      %12 = sbr.rel (0) target = $region9
    $region8: #{tpu_custom_call.1} parent=1 // pred_region
      %14 = vsyncadd [#allocation5], 0
      %s16 = sshll.u32 %s1, 4
      %s17 = int_to_ptr.hbm [resolvable:$true] %s16
      %s18 = sshll.u32 [#allocation4], 4
      %s19 = int_to_ptr.vmem [resolvable:$true] %s18
      %21 = dma.hbm_to_vmem [thread:$0]  %s17, 256, %s19, [#allocation5]
    $region9: #{tpu_custom_call.1} parent=1 // pred_fallthru
      _
    // Predicated region
    $region10: #{tpu_custom_call.1} parent=1 // pred_check
      _
    $region11: #{tpu_custom_call.1} parent=1 // pred_check_branch
      %23 = sbr.rel (0) target = $region13
    $region12: #{tpu_custom_call.1} parent=1 // pred_region
      %25 = dma.done [#allocation5], 256
    $region13: #{tpu_custom_call.1} parent=1 // pred_fallthru
      _
    %p26 = scmp.eq.s32.totalorder 0, 0
    // Predicated region
    $region14: #{tpu_custom_call.1} parent=1 // pred_check
      %p27 = pneg %p26
    $region15: #{tpu_custom_call.1} parent=1 // pred_check_branch
      %29 = sbr.rel (%p27) target = $region17
    $region16: #{tpu_custom_call.1} parent=1 // pred_region
      %vm30 = vcmask 7168
      %31 = vst.msk [vmem:[#allocation2] sm:$0xff] %vm30, 0.0
    $region17: #{tpu_custom_call.1} parent=1 // pred_fallthru
      _
    %v32 = vld [vmem:[#allocation4] sm:$0xff]
    %v33 = vld [vmem:[#allocation4 + $0x8] sm:$0xff]
    %v34 = vmax.f32 %v32, 1e-06
    %v35 = vmax.f32 %v33, 1e-06
    %s36 = sld [smem:[#allocation3]]
    %v37 = vlog2.pop %v34
    %v38 = vmul.f32 %v37, 0.6931472
    %v39 = vlog2.pop %v35
    %v40 = vmul.f32 %v39, 0.6931472
    %v41 = vstv %s36
    %v42 = vmul.f32 %v41, %v38
    %v43 = vmul.f32 %v41, %v40
    %v44 = vmul.f32 %v42, 1.442695
    %v45 = vpow.pop %v44
    %v46 = vmul.f32 %v43, 1.442695
    %v47 = vpow.pop %v46
    %v48 = vld [vmem:[#allocation2] sm:$0xff]
    %v49 = vadd.f32 %v45, %v47
    %50 = vadd.xlane.f32.xlu0 %v49
    %v51 = vpop.xlane.xlu0 %50
    %v52 = vadd.f32 %v48, %v51
    %vm53 = vcmask 7168
    %54 = vst.msk [vmem:[#allocation2] sm:$0xff] %vm53, %v52
    // Predicated region
    $region18: #{tpu_custom_call.1} parent=1 // pred_check
      %p55 = pneg %p26
    $region19: #{tpu_custom_call.1} parent=1 // pred_check_branch
      %57 = sbr.rel (%p55) target = $region21
    $region20: #{tpu_custom_call.1} parent=1 // pred_region
      %v58 = vld [vmem:[#allocation2] sm:$0xff]
      %v59 = vmul.f32 %v58, 0.00390625
      %s60 = sld [smem:[#allocation3]]
      %v61 = vstv %s60
      %v62 = vrcp.pop %v61
      %v63 = vmul.f32 %v61, %v62
      %v64 = vsub.f32 1.0, %v63
      %v65 = vmul.f32 %v62, %v64
      %v66 = vadd.f32 %v62, %v65
      %vm67 = vweird.f32 %v61
      %vm68 = vweird.f32 %v62
      %vm69 = vmor %vm67, %vm68
      %v70 = vsel %vm69, %v62, %v66
      %v71 = vand.u32 2147483647, %v61
      %vm72 = vcmp.eq.f32.partialorder %v71, 8.507059e+37
      %v73 = vand.u32 %v61, 2147483648
      %v74 = vor.u32 1.1754944e-38, %v73
      %v75 = vsel %vm72, %v74, %v70
      %s76 = vtos %v75
      %v77 = vlog2.pop %v59
      %v78 = vmul.f32 %v77, 0.6931472
      %v79 = vstv %s76
      %v80 = vmul.f32 %v78, %v79
      %v81 = vmul.f32 %v80, 1.442695
      %v82 = vpow.pop %v81
      %83 = vst.msk [vmem:[%s2] sm:$0xff] %vm53, %v82
    $region21: #{tpu_custom_call.1} parent=1 // pred_fallthru
      _
    // Predicated region
    $region22: #{tpu_custom_call.1} parent=1 // pred_check
      _
    $region23: #{tpu_custom_call.1} parent=1 // pred_check_branch
      %85 = sbr.rel (0) target = $region25
    $region24: #{tpu_custom_call.1} parent=1 // pred_region
      _
    $region25: #{tpu_custom_call.1} parent=1 // pred_fallthru
      _
    // Predicated region
    $region26: #{tpu_custom_call.1} parent=1 // pred_check
      _
    $region27: #{tpu_custom_call.1} parent=1 // pred_check_branch
      %87 = sbr.rel (0) target = $region29
    $region28: #{tpu_custom_call.1} parent=1 // pred_region
      _
    $region29: #{tpu_custom_call.1} parent=1 // pred_fallthru
      _
    %88 = vsyncpa [#allocation5], 1

</llo_original>
